<compile_context>
chip_gen: v6e
topology: v6e:2x2x1
jax: 0.10.0
libtpu: 0.0.40
codegen_flags: <defaults>
</compile_context>

<pallas_src>
import jax
import jax.numpy as jnp
from jax import lax
from jax.experimental import pallas as pl
from jax.experimental.pallas import tpu as pltpu


# ---------------------------------------------------------------------------
# Generation-aware VMEM budgets.
# ---------------------------------------------------------------------------
def _vmem_capacity_bytes():
    try:
        info = pltpu.get_tpu_info()
        cap = int(getattr(info, "vmem_capacity_bytes", 0) or 0)
        if cap > 0:
            return cap
    except Exception:
        pass
    return 64 * 1024 * 1024      # conservative default: v7x per-TensorCore VMEM


def _vmem_budget_and_limit():
    cap = _vmem_capacity_bytes()
    budget = min(int(cap * 0.40), 48 * 1024 * 1024)   # target tile working set
    limit = min(int(cap * 0.90), 112 * 1024 * 1024)   # scoped limit for Mosaic
    return budget, limit


def _round_up(v, m):
    return ((v + m - 1) // m) * m


def _sublane_multiple(itemsize):
    # Packed dtypes tile (16|32, 128): keep second-to-last block dims aligned.
    return {1: 32, 2: 16, 4: 8}.get(itemsize, 8)


def _cost_estimate(E, B, IN, OUT, in_item, bias_item, out_item):
    return pl.CostEstimate(
        flops=2 * E * B * IN * OUT,
        transcendentals=0,
        bytes_accessed=(E * B * IN + E * IN * OUT) * in_item
        + E * OUT * bias_item
        + E * B * OUT * out_item,
    )


# ---------------------------------------------------------------------------
# Kernels.
# ---------------------------------------------------------------------------
def _fullk_kernel(x_ref, w_ref, b_ref, o_ref):
    # x_ref: (tb, IN)  w_ref: (IN, tn)  b_ref: (1, tn)  o_ref: (tb, tn)
    acc = jnp.dot(x_ref[...], w_ref[...], preferred_element_type=jnp.float32)
    o_ref[...] = (acc + b_ref[...].astype(jnp.float32)).astype(o_ref.dtype)


def _ktiled_kernel(x_ref, w_ref, b_ref, o_ref, acc_ref):
    # x_ref: (tb, tk)  w_ref: (1, tk, tn)  b_ref: (1, tn)  o_ref/acc_ref: (tb, tn)
    k = pl.program_id(3)
    partial = jnp.dot(x_ref[...], w_ref[0], preferred_element_type=jnp.float32)

    @pl.when(k == 0)
    def _assign():                 # first k step assigns: no zero-fill + RMW pass
        acc_ref[...] = partial

    @pl.when(k > 0)
    def _accumulate():
        acc_ref[...] += partial

    @pl.when(k == pl.num_programs(3) - 1)
    def _store():
        o_ref[...] = (acc_ref[...] + b_ref[...].astype(jnp.float32)
                      ).astype(o_ref.dtype)


def _folded_kernel(x_ref, w_ref, b_ref, o_ref):
    # x_ref: (e_blk, bc, IN)  w_ref: (e_blk, IN, OUT)  b_ref: (e_blk, 1, OUT)
    # o_ref: (bc, e_blk*OUT) -- lane-dense output slab for this ensemble block.
    e_blk = x_ref.shape[0]
    cols = []
    for e in range(e_blk):         # static unroll, e_blk capped at 8 by the chooser
        acc = jnp.dot(x_ref[e], w_ref[e], preferred_element_type=jnp.float32)
        cols.append(acc + b_ref[e].astype(jnp.float32))
    y = cols[0] if e_blk == 1 else jnp.concatenate(cols, axis=-1)
    o_ref[...] = y.astype(o_ref.dtype)


# ---------------------------------------------------------------------------
# Tiled path (full-K when possible, ragged dims zero-padded).
# ---------------------------------------------------------------------------
def _ensemble_fc_tiled(x, weight, bias, *, vmem_budget_bytes=None):
    E, B, IN = x.shape
    OUT = weight.shape[2]
    in_item = jnp.dtype(x.dtype).itemsize
    out_item = in_item
    bias_item = jnp.dtype(bias.dtype).itemsize
    sub_mult = _sublane_multiple(in_item)

    auto_budget, vmem_limit = _vmem_budget_and_limit()
    budget = auto_budget if vmem_budget_bytes is None else vmem_budget_bytes

    # --- lane (OUT) tile: multiple of 128, up to 512 / OUT_p ---
    OUT_p = _round_up(OUT, 128)
    if OUT_p <= 512:
        tn = OUT_p
    elif OUT_p % 512 == 0:
        tn = 512
    elif OUT_p % 256 == 0:
        tn = 256
    else:
        tn = 128

    def tile_bytes(tb, tk, k_steps, w_bufs):
        return (2 * tb * tk * in_item                  # double-buffered x tile
                + w_bufs * tk * tn * in_item           # weight stream
                + 2 * tb * tn * out_item               # double-buffered out tile
                + 2 * tn * bias_item
                + (tb * tn * 4 if k_steps > 1 else 0)  # f32 accumulator
                + tb * tn * 4)                         # f32 epilogue temporaries

    # --- reduction (IN) tile: prefer full-K (kills acc writeback + k axis) ---
    tb_ref = min(B, 256)
    if tile_bytes(tb_ref, IN, 1, 2) <= budget:
        tk, IN_p, k_steps, w_bufs = IN, IN, 1, 2
    else:
        w_bufs = 3                 # each weight tile is used once: deepen buffering
        tk = 256
        for cand in (2048, 1024, 512, 256):
            if cand <= IN and tile_bytes(tb_ref, cand, 2, w_bufs) <= budget:
                tk = cand
                break
        IN_p = _round_up(IN, tk)
        k_steps = IN_p // tk
        if k_steps == 1:           # degenerate split (tiny IN): back to full-K
            tk, w_bufs = IN_p, 2

    # --- batch tile: cover all of B when possible so each weight tile streams
    #     from HBM exactly once (weight traffic dominates at moderate B). ---
    if tile_bytes(B, tk, k_steps, w_bufs) <= budget:
        tb, B_p = B, B
    else:
        tb = sub_mult
        for cand in (1024, 512, 256, 128, 64, 32, 16, 8):
            if (cand % sub_mult == 0 and cand <= B
                    and tile_bytes(cand, tk, k_steps, w_bufs) <= budget):
                tb = cand
                break
        B_p = _round_up(B, tb)

    # --- zero-pad ragged dims to tile multiples (exact for the matmul) ---
    x_p = x
    if B_p != B or IN_p != IN:
        x_p = jnp.pad(x, ((0, 0), (0, B_p - B), (0, IN_p - IN)))
    w_p = weight
    if IN_p != IN or OUT_p != OUT:
        w_p = jnp.pad(weight, ((0, 0), (0, IN_p - IN), (0, OUT_p - OUT)))
    b_p = bias if OUT_p == OUT else jnp.pad(bias, ((0, 0), (0, OUT_p - OUT)))
    b3 = b_p.reshape(E, 1, OUT_p)  # bias kept 3-D: (1, tn) blocks are always legal

    cost = _cost_estimate(E, B, IN, OUT, in_item, bias_item, out_item)
    grid_b, grid_n = B_p // tb, OUT_p // tn

    if k_steps == 1:
        out_p = pl.pallas_call(
            _fullk_kernel,
            out_shape=jax.ShapeDtypeStruct((E, B_p, OUT_p), x.dtype),
            grid_spec=pltpu.PrefetchScalarGridSpec(
                num_scalar_prefetch=0,
                grid=(E, grid_b, grid_n),
                in_specs=[
                    pl.BlockSpec((None, tb, IN_p), lambda e, b, n: (e, b, 0)),
                    pl.BlockSpec((None, IN_p, tn), lambda e, b, n: (e, 0, n)),
                    pl.BlockSpec((None, 1, tn), lambda e, b, n: (e, 0, n)),
                ],
                out_specs=pl.BlockSpec((None, tb, tn), lambda e, b, n: (e, b, n)),
            ),
            compiler_params=pltpu.CompilerParams(
                dimension_semantics=("parallel", "parallel", "parallel"),
                vmem_limit_bytes=vmem_limit),
            cost_estimate=cost,
        )(x_p, w_p, b3)
    else:
        out_p = pl.pallas_call(
            _ktiled_kernel,
            out_shape=jax.ShapeDtypeStruct((E, B_p, OUT_p), x.dtype),
            grid_spec=pltpu.PrefetchScalarGridSpec(
                num_scalar_prefetch=0,
                grid=(E, grid_b, grid_n, k_steps),        # reduction axis last
                in_specs=[
                    pl.BlockSpec((None, tb, tk), lambda e, b, n, k: (e, b, k)),
                    pl.BlockSpec((1, tk, tn), lambda e, b, n, k: (e, k, n),
                                 pipeline_mode=pl.Buffered(3)),
                    pl.BlockSpec((None, 1, tn), lambda e, b, n, k: (e, 0, n)),
                ],
                out_specs=pl.BlockSpec((None, tb, tn),
                                       lambda e, b, n, k: (e, b, n)),
                scratch_shapes=[pltpu.VMEM((tb, tn), jnp.float32)],
            ),
            compiler_params=pltpu.CompilerParams(
                dimension_semantics=("parallel", "parallel", "parallel",
                                     "arbitrary"),
                vmem_limit_bytes=vmem_limit),
            cost_estimate=cost,
        )(x_p, w_p, b3)

    if B_p != B or OUT_p != OUT:
        out_p = out_p[:, :B, :OUT]
    return out_p


# ---------------------------------------------------------------------------
# Folded path (small members, OUT not a multiple of 128).
# ---------------------------------------------------------------------------
def _choose_folded_blocks(E, B, IN, OUT, itemsize, budget, unroll_cap=8):
    def step_bytes(d):
        return (2 * d * (B * IN + IN * OUT + OUT) * itemsize   # double-buffered ins
                + 2 * d * B * OUT * itemsize                   # double-buffered slab
                + d * B * OUT * 4)                             # f32 temporaries

    cands = [d for d in range(1, min(E, unroll_cap) + 1)
             if E % d == 0 and (d * OUT) % 128 == 0 and step_bytes(d) <= budget]
    if not cands:
        # A slab equal to the full (B, E*OUT) output is always layout-legal.
        if E <= unroll_cap and step_bytes(E) <= budget:
            cands = [E]
        else:
            return None, None
    e_blk = max(cands)

    # If everything folded into one grid step and the work is non-trivial, split
    # the batch so both v7x TensorCores get work (harmless on 1-TC v5e/v6e).
    n_bsplit = 1
    sub_mult = _sublane_multiple(itemsize)
    if (E // e_blk == 1 and 2 * e_blk * B * IN * OUT >= (8 << 20)
            and B % 2 == 0 and (B // 2) % sub_mult == 0):
        n_bsplit = 2
    return e_blk, n_bsplit


def _ensemble_fc_folded(x, weight, bias, e_blk, n_bsplit):
    E, B, IN = x.shape
    OUT = weight.shape[2]
    in_item = jnp.dtype(x.dtype).itemsize
    bias_item = jnp.dtype(bias.dtype).itemsize
    _, vmem_limit = _vmem_budget_and_limit()

    n_blocks = E // e_blk
    bc = B // n_bsplit
    b3 = bias.reshape(E, 1, OUT)      # (1, OUT) trailing dims: always layout-legal
    cost = _cost_estimate(E, B, IN, OUT, in_item, bias_item, in_item)

    out2d = pl.pallas_call(
        _folded_kernel,
        out_shape=jax.ShapeDtypeStruct((B, E * OUT), x.dtype),
        grid_spec=pltpu.PrefetchScalarGridSpec(
            num_scalar_prefetch=0,
            grid=(n_blocks, n_bsplit),
            in_specs=[
                pl.BlockSpec((e_blk, bc, IN), lambda eb, bi: (eb, bi, 0)),
                pl.BlockSpec((e_blk, IN, OUT), lambda eb, bi: (eb, 0, 0)),
                pl.BlockSpec((e_blk, 1, OUT), lambda eb, bi: (eb, 0, 0)),
            ],
            out_specs=pl.BlockSpec((bc, e_blk * OUT), lambda eb, bi: (bi, eb)),
        ),
        compiler_params=pltpu.CompilerParams(
            dimension_semantics=("parallel", "parallel"),
            vmem_limit_bytes=vmem_limit),
        cost_estimate=cost,
    )(x, weight, b3)

    # (B, E*OUT) -> (E, B, OUT): wrapper-side layout plumbing only.
    return jnp.transpose(out2d.reshape(B, E, OUT), (1, 0, 2))


# ---------------------------------------------------------------------------
# Public wrapper (matches the PyTorch module's forward).
# ---------------------------------------------------------------------------
def ensemble_fc(x, weight, bias):
    """x: [E, B, IN], weight: [E, IN, OUT], bias: [E, OUT] -> [E, B, OUT]."""
    E, B, IN = x.shape
    Ew, INw, OUT = weight.shape
    assert Ew == E and INw == IN and bias.shape == (E, OUT)

    if OUT % 128 != 0:
        budget, _ = _vmem_budget_and_limit()
        e_blk, n_bsplit = _choose_folded_blocks(
            E, B, IN, OUT, jnp.dtype(x.dtype).itemsize, budget)
        if e_blk is not None:
            return _ensemble_fc_folded(x, weight, bias, e_blk, n_bsplit)
    # Lane-aligned OUT, or a layer too large to fold whole members into VMEM:
    # reuse-aware MXU tiling with ragged dims zero-padded to tile multiples.
    return _ensemble_fc_tiled(x, weight, bias)


if __name__ == "__main__":
    key = jax.random.PRNGKey(0)

    def reference(x, w, b):
        return (jnp.einsum("ebi,eio->ebo",
                           x.astype(jnp.float32), w.astype(jnp.float32),
                           precision=lax.Precision.HIGHEST)
                + b.astype(jnp.float32)[:, None, :])

    # ---- 1) Small demo shapes (OUT < 128): folded, lane-dense slab path ----
    E, B, IN, OUT = 4, 8, 32, 32
    k1, k2, k3, key = jax.random.split(key, 4)
    x = jax.random.normal(k1, (E, B, IN), dtype=jnp.float32)
    w = jax.random.normal(k2, (E, IN, OUT), dtype=jnp.float32) / jnp.sqrt(IN)
    b = jax.random.normal(k3, (E, OUT), dtype=jnp.float32) * 0.1
    out = jax.block_until_ready(ensemble_fc(x, w, b))
    assert out.shape == (E, B, OUT)
    assert jnp.allclose(out, reference(x, w, b), atol=1e-3, rtol=1e-3), \
        "folded path mismatch"

    # ---- 2) Mid-size bf16: full-K tiled path (tb = B, tn = OUT, no k axis) ----
    E2, B2, IN2, OUT2 = 2, 256, 1024, 512
    k1, k2, k3, key = jax.random.split(key, 4)
    x2 = jax.random.normal(k1, (E2, B2, IN2), jnp.float32).astype(jnp.bfloat16)
    w2 = (jax.random.normal(k2, (E2, IN2, OUT2), jnp.float32)
          / jnp.sqrt(IN2)).astype(jnp.bfloat16)
    b2 = jax.random.normal(k3, (E2, OUT2), jnp.float32) * 0.1
    out2 = jax.block_until_ready(ensemble_fc(x2, w2, b2))
    assert out2.shape == (E2, B2, OUT2)
    assert jnp.allclose(out2.astype(jnp.float32), reference(x2, w2, b2),
                        atol=3e-2, rtol=3e-2), "full-K tiled path mismatch"

    # ---- 3) Ragged shapes + tiny forced budget: k-tiled kernel with padding ----
    E3, B3, IN3, OUT3 = 2, 50, 300, 200
    k1, k2, k3, key = jax.random.split(key, 4)
    x3 = jax.random.normal(k1, (E3, B3, IN3), dtype=jnp.float32)
    w3 = jax.random.normal(k2, (E3, IN3, OUT3), dtype=jnp.float32) / jnp.sqrt(IN3)
    b3 = jax.random.normal(k3, (E3, OUT3), dtype=jnp.float32) * 0.1
    out3 = jax.block_until_ready(
        _ensemble_fc_tiled(x3, w3, b3, vmem_budget_bytes=512 * 1024))
    assert out3.shape == (E3, B3, OUT3)
    assert jnp.allclose(out3, reference(x3, w3, b3), atol=1e-3, rtol=1e-3), \
        "k-tiled/padded path mismatch"

    print("KERNEL_OK")
</pallas_src>

<mosaic_0001>
module attributes {stable_mosaic.version = 11 : i64} {
  func.func @_folded_kernel(%arg0: i32, %arg1: i32, %arg2: memref<4x8x32xf32, #tpu.memory_space<vmem>>, %arg3: memref<4x32x32xf32, #tpu.memory_space<vmem>>, %arg4: memref<4x1x32xf32, #tpu.memory_space<vmem>>, %arg5: memref<8x128xf32, #tpu.memory_space<vmem>>) attributes {dimension_semantics = [#tpu.dimension_semantics<parallel>, #tpu.dimension_semantics<parallel>], iteration_bounds = array<i64: 1, 1>, scalar_prefetch = 0 : i64, scratch_operands = 0 : i64, tpu.core_type = #tpu.core_type<tc>, window_params = [{transform_indices = @transform_0, window_bounds = array<i64: 4, 8, 32>}, {transform_indices = @transform_1, window_bounds = array<i64: 4, 32, 32>}, {transform_indices = @transform_2, window_bounds = array<i64: 4, 1, 32>}, {transform_indices = @transform_3, window_bounds = array<i64: 8, 128>}]} {
    %c0 = arith.constant 0 : index
    %c0_0 = arith.constant 0 : index
    %c0_1 = arith.constant 0 : index
    %0 = vector.load %arg2[%c0, %c0_0, %c0_1] : memref<4x8x32xf32, #tpu.memory_space<vmem>>, vector<1x8x32xf32>
    %1 = vector.shape_cast %0 : vector<1x8x32xf32> to vector<8x32xf32>
    %c0_2 = arith.constant 0 : index
    %c0_3 = arith.constant 0 : index
    %c0_4 = arith.constant 0 : index
    %2 = vector.load %arg3[%c0_2, %c0_3, %c0_4] : memref<4x32x32xf32, #tpu.memory_space<vmem>>, vector<1x32x32xf32>
    %3 = vector.shape_cast %2 : vector<1x32x32xf32> to vector<32x32xf32>
    %cst = arith.constant dense<0.000000e+00> : vector<8x32xf32>
    %4 = tpu.matmul %1, %3, %cst {dimension_numbers = #tpu.dot_dimension_numbers<[1], [0], [0], [1], [0, 0, 1, 1], [], []>} : vector<8x32xf32>, vector<32x32xf32>, vector<8x32xf32> -> vector<8x32xf32>
    %c0_5 = arith.constant 0 : index
    %c0_6 = arith.constant 0 : index
    %c0_7 = arith.constant 0 : index
    %5 = vector.load %arg4[%c0_5, %c0_6, %c0_7] : memref<4x1x32xf32, #tpu.memory_space<vmem>>, vector<1x1x32xf32>
    %6 = vector.shape_cast %5 : vector<1x1x32xf32> to vector<1x32xf32>
    %7 = vector.broadcast %6 : vector<1x32xf32> to vector<8x32xf32>
    %8 = arith.addf %4, %7 : vector<8x32xf32>
    %c1 = arith.constant 1 : index
    %c0_8 = arith.constant 0 : index
    %c0_9 = arith.constant 0 : index
    %9 = vector.load %arg2[%c1, %c0_8, %c0_9] : memref<4x8x32xf32, #tpu.memory_space<vmem>>, vector<1x8x32xf32>
    %10 = vector.shape_cast %9 : vector<1x8x32xf32> to vector<8x32xf32>
    %c1_10 = arith.constant 1 : index
    %c0_11 = arith.constant 0 : index
    %c0_12 = arith.constant 0 : index
    %11 = vector.load %arg3[%c1_10, %c0_11, %c0_12] : memref<4x32x32xf32, #tpu.memory_space<vmem>>, vector<1x32x32xf32>
    %12 = vector.shape_cast %11 : vector<1x32x32xf32> to vector<32x32xf32>
    %cst_13 = arith.constant dense<0.000000e+00> : vector<8x32xf32>
    %13 = tpu.matmul %10, %12, %cst_13 {dimension_numbers = #tpu.dot_dimension_numbers<[1], [0], [0], [1], [0, 0, 1, 1], [], []>} : vector<8x32xf32>, vector<32x32xf32>, vector<8x32xf32> -> vector<8x32xf32>
    %c1_14 = arith.constant 1 : index
    %c0_15 = arith.constant 0 : index
    %c0_16 = arith.constant 0 : index
    %14 = vector.load %arg4[%c1_14, %c0_15, %c0_16] : memref<4x1x32xf32, #tpu.memory_space<vmem>>, vector<1x1x32xf32>
    %15 = vector.shape_cast %14 : vector<1x1x32xf32> to vector<1x32xf32>
    %16 = vector.broadcast %15 : vector<1x32xf32> to vector<8x32xf32>
    %17 = arith.addf %13, %16 : vector<8x32xf32>
    %c2 = arith.constant 2 : index
    %c0_17 = arith.constant 0 : index
    %c0_18 = arith.constant 0 : index
    %18 = vector.load %arg2[%c2, %c0_17, %c0_18] : memref<4x8x32xf32, #tpu.memory_space<vmem>>, vector<1x8x32xf32>
    %19 = vector.shape_cast %18 : vector<1x8x32xf32> to vector<8x32xf32>
    %c2_19 = arith.constant 2 : index
    %c0_20 = arith.constant 0 : index
    %c0_21 = arith.constant 0 : index
    %20 = vector.load %arg3[%c2_19, %c0_20, %c0_21] : memref<4x32x32xf32, #tpu.memory_space<vmem>>, vector<1x32x32xf32>
    %21 = vector.shape_cast %20 : vector<1x32x32xf32> to vector<32x32xf32>
    %cst_22 = arith.constant dense<0.000000e+00> : vector<8x32xf32>
    %22 = tpu.matmul %19, %21, %cst_22 {dimension_numbers = #tpu.dot_dimension_numbers<[1], [0], [0], [1], [0, 0, 1, 1], [], []>} : vector<8x32xf32>, vector<32x32xf32>, vector<8x32xf32> -> vector<8x32xf32>
    %c2_23 = arith.constant 2 : index
    %c0_24 = arith.constant 0 : index
    %c0_25 = arith.constant 0 : index
    %23 = vector.load %arg4[%c2_23, %c0_24, %c0_25] : memref<4x1x32xf32, #tpu.memory_space<vmem>>, vector<1x1x32xf32>
    %24 = vector.shape_cast %23 : vector<1x1x32xf32> to vector<1x32xf32>
    %25 = vector.broadcast %24 : vector<1x32xf32> to vector<8x32xf32>
    %26 = arith.addf %22, %25 : vector<8x32xf32>
    %c3 = arith.constant 3 : index
    %c0_26 = arith.constant 0 : index
    %c0_27 = arith.constant 0 : index
    %27 = vector.load %arg2[%c3, %c0_26, %c0_27] : memref<4x8x32xf32, #tpu.memory_space<vmem>>, vector<1x8x32xf32>
    %28 = vector.shape_cast %27 : vector<1x8x32xf32> to vector<8x32xf32>
    %c3_28 = arith.constant 3 : index
    %c0_29 = arith.constant 0 : index
    %c0_30 = arith.constant 0 : index
    %29 = vector.load %arg3[%c3_28, %c0_29, %c0_30] : memref<4x32x32xf32, #tpu.memory_space<vmem>>, vector<1x32x32xf32>
    %30 = vector.shape_cast %29 : vector<1x32x32xf32> to vector<32x32xf32>
    %cst_31 = arith.constant dense<0.000000e+00> : vector<8x32xf32>
    %31 = tpu.matmul %28, %30, %cst_31 {dimension_numbers = #tpu.dot_dimension_numbers<[1], [0], [0], [1], [0, 0, 1, 1], [], []>} : vector<8x32xf32>, vector<32x32xf32>, vector<8x32xf32> -> vector<8x32xf32>
    %c3_32 = arith.constant 3 : index
    %c0_33 = arith.constant 0 : index
    %c0_34 = arith.constant 0 : index
    %32 = vector.load %arg4[%c3_32, %c0_33, %c0_34] : memref<4x1x32xf32, #tpu.memory_space<vmem>>, vector<1x1x32xf32>
    %33 = vector.shape_cast %32 : vector<1x1x32xf32> to vector<1x32xf32>
    %34 = vector.broadcast %33 : vector<1x32xf32> to vector<8x32xf32>
    %35 = arith.addf %31, %34 : vector<8x32xf32>
    %36 = tpu.concatenate %8, %17, %26, %35 in 1 : vector<8x32xf32>, vector<8x32xf32>, vector<8x32xf32>, vector<8x32xf32> -> vector<8x128xf32>
    %c0_35 = arith.constant 0 : index
    %c0_36 = arith.constant 0 : index
    %37 = vector.load %arg5[%c0_35, %c0_36] : memref<8x128xf32, #tpu.memory_space<vmem>>, vector<8x128xf32>
    tpu.vector_store %arg5[%c0_35, %c0_36], %36 {strides = array<i32>} : memref<8x128xf32, #tpu.memory_space<vmem>>, vector<8x128xf32>,
    return
  }
  func.func @transform_0(%arg0: i32, %arg1: i32) -> (i32, i32, i32) {
    %c0_i32 = arith.constant 0 : i32
    %c0_i32_0 = arith.constant 0 : i32
    return %arg0, %arg1, %c0_i32 : i32, i32, i32
  }
  func.func @transform_1(%arg0: i32, %arg1: i32) -> (i32, i32, i32) {
    %c0_i32 = arith.constant 0 : i32
    %c0_i32_0 = arith.constant 0 : i32
    %c0_i32_1 = arith.constant 0 : i32
    return %arg0, %c0_i32, %c0_i32_0 : i32, i32, i32
  }
  func.func @transform_2(%arg0: i32, %arg1: i32) -> (i32, i32, i32) {
    %c0_i32 = arith.constant 0 : i32
    %c0_i32_0 = arith.constant 0 : i32
    %c0_i32_1 = arith.constant 0 : i32
    return %arg0, %c0_i32, %c0_i32_0 : i32, i32, i32
  }
  func.func @transform_3(%arg0: i32, %arg1: i32) -> (i32, i32) {
    %c0_i32 = arith.constant 0 : i32
    return %arg1, %arg0 : i32, i32
  }
}

</mosaic_0001>

<llo_original>
// kernel: tpu_custom_call.1
$region0: #{tpu_custom_call.1}
  #allocation0 [shape = 'u32[]', space=smem, size = 0x4, offset = 0x4, fixed_abs, tag = 'smem constant byte address 0x4 - core index']
  #allocation1 [shape = 'u32[144,128]{1,0:T(1,128)}', space=vmem, size = 0x12000, scoped, tag = 'internal scratch']
  %s0 = inlined_call_operand.hbm [shape: f32[4,8,32], index: 0, kind: input, shape index: {}]
  %s1 = inlined_call_operand.hbm [shape: f32[4,32,32], index: 1, kind: input, shape index: {}]
  %s2 = inlined_call_operand.hbm [shape: f32[4,1,32], index: 2, kind: input, shape index: {}]
  %s3 = inlined_call_operand.hbm [shape: f32[8,128], index: 3, kind: output, shape index: {}]
  %s4 = sld [smem:[#allocation0]]
  $region34: #{tpu_custom_call.1} parent=0
    _
  %s6 = ssub.s32 1, %s4
  %s7 = scalar_select 0, %s6, %s4
  $region1: #{tpu_custom_call.1} parent=0
    #allocation2 [shape = 'u8[16384]{0}', space=vmem, size = 0x4000, scoped, tag = 'input window, operand 0, single buffered']
    #allocation3 [shape = 's32[1]{0}', space=sflag, size = 0x4, scoped, tag = 'scoped memory for tpu_custom_call.1']
    #allocation4 [shape = 's32[1]{0}', space=sflag, size = 0x4, scoped, tag = 'scoped memory for tpu_custom_call.1']
    #allocation5 [shape = 'u8[65536]{0}', space=vmem, size = 0x10000, scoped, tag = 'input window, operand 1, single buffered']
    #allocation6 [shape = 's32[1]{0}', space=sflag, size = 0x4, scoped, tag = 'scoped memory for tpu_custom_call.1']
    #allocation7 [shape = 'u8[2048]{0}', space=vmem, size = 0x800, scoped, tag = 'input window, operand 2, single buffered']
    #allocation8 [shape = 'u8[4096]{0}', space=vmem, size = 0x1000, scoped, tag = 'output window, operand 0, single buffered']
    %8 = vsyncpa [#allocation3], 0
    %9 = vsyncpa [#allocation6], 0
    %10 = vsyncpa [#allocation4], 0
    // Predicated region
    $region2: #{tpu_custom_call.1} parent=1 // pred_check
      _
    $region3: #{tpu_custom_call.1} parent=1 // pred_check_branch
      %12 = sbr.rel (0) target = $region5
    $region4: #{tpu_custom_call.1} parent=1 // pred_region
      %s14 = ssub.s32 512, 512
      %15 = vsyncadd [#allocation3], %s14
      %s16 = sshll.u32 [#allocation2], 4
      %s17 = int_to_ptr.vmem [resolvable:$true] %s16
      %22 = dma.hbm_to_vmem [thread:$0]  %s0, 512, %s17, [#allocation3], 128, 128, 8
    $region5: #{tpu_custom_call.1} parent=1 // pred_fallthru
      _
    // Predicated region
    $region6: #{tpu_custom_call.1} parent=1 // pred_check
      _
    $region7: #{tpu_custom_call.1} parent=1 // pred_check_branch
      %24 = sbr.rel (0) target = $region9
    $region8: #{tpu_custom_call.1} parent=1 // pred_region
      %s26 = ssub.s32 2048, 2048
      %27 = vsyncadd [#allocation6], %s26
      %s28 = sshll.u32 [#allocation5], 4
      %s29 = int_to_ptr.vmem [resolvable:$true] %s28
      %34 = dma.hbm_to_vmem [thread:$0]  %s1, 2048, %s29, [#allocation6], 128, 128, 8
    $region9: #{tpu_custom_call.1} parent=1 // pred_fallthru
      _
    // Predicated region
    $region10: #{tpu_custom_call.1} parent=1 // pred_check
      _
    $region11: #{tpu_custom_call.1} parent=1 // pred_check_branch
      %36 = sbr.rel (0) target = $region13
    $region12: #{tpu_custom_call.1} parent=1 // pred_region
      %s38 = ssub.s32 64, 64
      %39 = vsyncadd [#allocation6], %s38
      %s40 = sshll.u32 [#allocation7], 4
      %s41 = int_to_ptr.vmem [resolvable:$true] %s40
      %46 = dma.hbm_to_vmem [thread:$0]  %s2, 64, %s41, [#allocation6], 16, 16, 1
    $region13: #{tpu_custom_call.1} parent=1 // pred_fallthru
      _
    // Predicated region
    $region14: #{tpu_custom_call.1} parent=1 // pred_check
      _
    $region15: #{tpu_custom_call.1} parent=1 // pred_check_branch
      %48 = sbr.rel (0) target = $region17
    $region16: #{tpu_custom_call.1} parent=1 // pred_region
      %49 = dma.done [#allocation3], 512
    $region17: #{tpu_custom_call.1} parent=1 // pred_fallthru
      _
    // Predicated region
    $region18: #{tpu_custom_call.1} parent=1 // pred_check
      _
    $region19: #{tpu_custom_call.1} parent=1 // pred_check_branch
      %51 = sbr.rel (0) target = $region21
    $region20: #{tpu_custom_call.1} parent=1 // pred_region
      %52 = dma.done [#allocation6], 2048
    $region21: #{tpu_custom_call.1} parent=1 // pred_fallthru
      _
    // Predicated region
    $region22: #{tpu_custom_call.1} parent=1 // pred_check
      _
    $region23: #{tpu_custom_call.1} parent=1 // pred_check_branch
      %54 = sbr.rel (0) target = $region25
    $region24: #{tpu_custom_call.1} parent=1 // pred_region
      %55 = dma.done [#allocation6], 64
    $region25: #{tpu_custom_call.1} parent=1 // pred_fallthru
      _
    %v56 = vld [vmem:[#allocation2] sm:$0xff]
    %v57 = vld [vmem:[#allocation5] sm:$0xff]
    %v58 = vld [vmem:[#allocation5 + $0x8] sm:$0xff]
    %v59 = vld [vmem:[#allocation5 + $0x10] sm:$0xff]
    %v60 = vld [vmem:[#allocation5 + $0x18] sm:$0xff]
    %v61 = vld [vmem:[#allocation7] sm:$0x1]
    %v63 = vlaneseq
    %v64 = vshrl.u32 %v63, 7
    %v65 = vsub.s32 0, %v64
    %v66 = vrot.slane %v61, %v65
    %vm68 = vcmask 261120
    %v70 = vsel %vm68, %v56, 0
    %72 = vmatprep.subr.mxu0 0.0
    %73 = vmatpush1.msra.mxu0 0.0
    %74 = vmatprep.subr.mxu0 0.0
    %75 = vmatpush1.msra.mxu0 0.0
    %76 = vmatprep.subr.mxu0 0.0
    %77 = vmatpush1.msra.mxu0 0.0
    %78 = vmatprep.subr.mxu0 0.0
    %79 = vmatpush1.msra.mxu0 0.0
    %80 = vmatprep.subr.mxu0 0.0
    %81 = vmatpush1.msra.mxu0 0.0
    %82 = vmatprep.subr.mxu0 0.0
    %83 = vmatpush1.msra.mxu0 0.0
    %84 = vmatprep.subr.mxu0 0.0
    %85 = vmatpush1.msra.mxu0 0.0
    %86 = vmatprep.subr.mxu0 0.0
    %87 = vmatpush1.msra.mxu0 0.0
    %88 = vmatprep.subr.mxu0 0.0
    %89 = vmatpush1.msra.mxu0 0.0
    %90 = vmatprep.subr.mxu0 0.0
    %91 = vmatpush1.msra.mxu0 0.0
    %92 = vmatprep.subr.mxu0 0.0
    %93 = vmatpush1.msra.mxu0 0.0
    %94 = vmatprep.subr.mxu0 0.0
    %95 = vmatpush1.msra.mxu0 0.0
    %96 = vmatprep.subr.mxu0 0.0
    %97 = vmatpush1.msra.mxu0 %v60
    %98 = vmatprep.subr.mxu0 0.0
    %99 = vmatpush1.msra.mxu0 %v59
    %100 = vmatprep.subr.mxu0 0.0
    %101 = vmatpush1.msra.mxu0 %v58
    %102 = vmatprep.subr.mxu0 0.0
    %103 = vmatpush1.msra.mxu0 %v57
    %104 = vmatprep.subr.mxu0 0.0
    %105 = vmatpush2.msra.mxu0 0.0
    %106 = vmatprep.subr.mxu0 0.0
    %107 = vmatpush2.msra.mxu0 0.0
    %108 = vmatprep.subr.mxu0 0.0
    %109 = vmatpush2.msra.mxu0 0.0
    %110 = vmatprep.subr.mxu0 0.0
    %111 = vmatpush2.msra.mxu0 0.0
    %112 = vmatprep.subr.mxu0 0.0
    %113 = vmatpush2.msra.mxu0 0.0
    %114 = vmatprep.subr.mxu0 0.0
    %115 = vmatpush2.msra.mxu0 0.0
    %116 = vmatprep.subr.mxu0 0.0
    %117 = vmatpush2.msra.mxu0 0.0
    %118 = vmatprep.subr.mxu0 0.0
    %119 = vmatpush2.msra.mxu0 0.0
    %120 = vmatprep.subr.mxu0 0.0
    %121 = vmatpush2.msra.mxu0 0.0
    %122 = vmatprep.subr.mxu0 0.0
    %123 = vmatpush2.msra.mxu0 0.0
    %124 = vmatprep.subr.mxu0 0.0
    %125 = vmatpush2.msra.mxu0 0.0
    %126 = vmatprep.subr.mxu0 0.0
    %127 = vmatpush2.msra.mxu0 0.0
    %128 = vmatprep.subr.mxu0 0.0
    %129 = vmatpush2.msra.mxu0 0.0
    %130 = vmatprep.subr.mxu0 0.0
    %131 = vmatpush2.msra.mxu0 0.0
    %132 = vmatprep.subr.mxu0 0.0
    %133 = vmatpush2.msra.mxu0 0.0
    %134 = vmatprep.subr.mxu0 0.0
    %135 = vmatpush2.msra.mxu0 0.0
    %136 = vmatprep.mubr.f32.mxu0 0.0
    %137 = vmatmul.mubr.f32.gmra.mxu0 %v70
    %v138 = vpop.f32.mrf.mxu0
    %v139 = vadd.f32 %v66, %v138
    %v140 = vpop.f32.mrf.mxu0
    %141 = vdwg.mxu0
    %s142 = scalar_lea.vmem [#allocation2], 8
    %v143 = vld [vmem:[%s142] sm:$0xff]
    %s144 = scalar_lea.vmem [#allocation5], 32
    %v145 = vld [vmem:[%s144] sm:$0xff]
    %v146 = vld [vmem:[%s144 + $0x8] sm:$0xff]
    %v147 = vld [vmem:[%s144 + $0x10] sm:$0xff]
    %v148 = vld [vmem:[%s144 + $0x18] sm:$0xff]
    %s149 = scalar_lea.vmem [#allocation7], 1
    %v150 = vld [vmem:[%s149] sm:$0x1]
    %v152 = vlaneseq
    %v153 = vshrl.u32 %v152, 7
    %v154 = vsub.s32 0, %v153
    %v155 = vrot.slane %v150, %v154
    %v158 = vsel %vm68, %v143, 0
    %160 = vmatprep.subr.mxu0 0.0
    %161 = vmatpush1.msra.mxu0 0.0
    %162 = vmatprep.subr.mxu0 0.0
    %163 = vmatpush1.msra.mxu0 0.0
    %164 = vmatprep.subr.mxu0 0.0
    %165 = vmatpush1.msra.mxu0 0.0
    %166 = vmatprep.subr.mxu0 0.0
    %167 = vmatpush1.msra.mxu0 0.0
    %168 = vmatprep.subr.mxu0 0.0
    %169 = vmatpush1.msra.mxu0 0.0
    %170 = vmatprep.subr.mxu0 0.0
    %171 = vmatpush1.msra.mxu0 0.0
    %172 = vmatprep.subr.mxu0 0.0
    %173 = vmatpush1.msra.mxu0 0.0
    %174 = vmatprep.subr.mxu0 0.0
    %175 = vmatpush1.msra.mxu0 0.0
    %176 = vmatprep.subr.mxu0 0.0
    %177 = vmatpush1.msra.mxu0 0.0
    %178 = vmatprep.subr.mxu0 0.0
    %179 = vmatpush1.msra.mxu0 0.0
    %180 = vmatprep.subr.mxu0 0.0
    %181 = vmatpush1.msra.mxu0 0.0
    %182 = vmatprep.subr.mxu0 0.0
    %183 = vmatpush1.msra.mxu0 0.0
    %184 = vmatprep.subr.mxu0 0.0
    %185 = vmatpush1.msra.mxu0 %v148
    %186 = vmatprep.subr.mxu0 0.0
    %187 = vmatpush1.msra.mxu0 %v147
    %188 = vmatprep.subr.mxu0 0.0
    %189 = vmatpush1.msra.mxu0 %v146
    %190 = vmatprep.subr.mxu0 0.0
    %191 = vmatpush1.msra.mxu0 %v145
    %192 = vmatprep.subr.mxu0 0.0
    %193 = vmatpush2.msra.mxu0 0.0
    %194 = vmatprep.subr.mxu0 0.0
    %195 = vmatpush2.msra.mxu0 0.0
    %196 = vmatprep.subr.mxu0 0.0
    %197 = vmatpush2.msra.mxu0 0.0
    %198 = vmatprep.subr.mxu0 0.0
    %199 = vmatpush2.msra.mxu0 0.0
    %200 = vmatprep.subr.mxu0 0.0
    %201 = vmatpush2.msra.mxu0 0.0
    %202 = vmatprep.subr.mxu0 0.0
    %203 = vmatpush2.msra.mxu0 0.0
    %204 = vmatprep.subr.mxu0 0.0
    %205 = vmatpush2.msra.mxu0 0.0
    %206 = vmatprep.subr.mxu0 0.0
    %207 = vmatpush2.msra.mxu0 0.0
    %208 = vmatprep.subr.mxu0 0.0
    %209 = vmatpush2.msra.mxu0 0.0
    %210 = vmatprep.subr.mxu0 0.0
    %211 = vmatpush2.msra.mxu0 0.0
    %212 = vmatprep.subr.mxu0 0.0
    %213 = vmatpush2.msra.mxu0 0.0
    %214 = vmatprep.subr.mxu0 0.0
    %215 = vmatpush2.msra.mxu0 0.0
    %216 = vmatprep.subr.mxu0 0.0
    %217 = vmatpush2.msra.mxu0 0.0
    %218 = vmatprep.subr.mxu0 0.0
    %219 = vmatpush2.msra.mxu0 0.0
    %220 = vmatprep.subr.mxu0 0.0
    %221 = vmatpush2.msra.mxu0 0.0
    %222 = vmatprep.subr.mxu0 0.0
    %223 = vmatpush2.msra.mxu0 0.0
    %224 = vmatprep.mubr.f32.mxu0 0.0
    %225 = vmatmul.mubr.f32.gmra.mxu0 %v158
    %v226 = vpop.f32.mrf.mxu0
    %v227 = vadd.f32 %v155, %v226
    %v228 = vpop.f32.mrf.mxu0
    %229 = vdwg.mxu0
    %s230 = scalar_lea.vmem [#allocation2], 16
    %v231 = vld [vmem:[%s230] sm:$0xff]
    %s232 = scalar_lea.vmem [#allocation5], 64
    %v233 = vld [vmem:[%s232] sm:$0xff]
    %v234 = vld [vmem:[%s232 + $0x8] sm:$0xff]
    %v235 = vld [vmem:[%s232 + $0x10] sm:$0xff]
    %v236 = vld [vmem:[%s232 + $0x18] sm:$0xff]
    %s237 = scalar_lea.vmem [#allocation7], 2
    %v238 = vld [vmem:[%s237] sm:$0x1]
    %v240 = vlaneseq
    %v241 = vshrl.u32 %v240, 7
    %v242 = vsub.s32 0, %v241
    %v243 = vrot.slane %v238, %v242
    %v246 = vsel %vm68, %v231, 0
    %248 = vmatprep.subr.mxu0 0.0
    %249 = vmatpush1.msra.mxu0 0.0
    %250 = vmatprep.subr.mxu0 0.0
    %251 = vmatpush1.msra.mxu0 0.0
    %252 = vmatprep.subr.mxu0 0.0
    %253 = vmatpush1.msra.mxu0 0.0
    %254 = vmatprep.subr.mxu0 0.0
    %255 = vmatpush1.msra.mxu0 0.0
    %256 = vmatprep.subr.mxu0 0.0
    %257 = vmatpush1.msra.mxu0 0.0
    %258 = vmatprep.subr.mxu0 0.0
    %259 = vmatpush1.msra.mxu0 0.0
    %260 = vmatprep.subr.mxu0 0.0
    %261 = vmatpush1.msra.mxu0 0.0
    %262 = vmatprep.subr.mxu0 0.0
    %263 = vmatpush1.msra.mxu0 0.0
    %264 = vmatprep.subr.mxu0 0.0
    %265 = vmatpush1.msra.mxu0 0.0
    %266 = vmatprep.subr.mxu0 0.0
    %267 = vmatpush1.msra.mxu0 0.0
    %268 = vmatprep.subr.mxu0 0.0
    %269 = vmatpush1.msra.mxu0 0.0
    %270 = vmatprep.subr.mxu0 0.0
    %271 = vmatpush1.msra.mxu0 0.0
    %272 = vmatprep.subr.mxu0 0.0
    %273 = vmatpush1.msra.mxu0 %v236
    %274 = vmatprep.subr.mxu0 0.0
    %275 = vmatpush1.msra.mxu0 %v235
    %276 = vmatprep.subr.mxu0 0.0
    %277 = vmatpush1.msra.mxu0 %v234
    %278 = vmatprep.subr.mxu0 0.0
    %279 = vmatpush1.msra.mxu0 %v233
    %280 = vmatprep.subr.mxu0 0.0
    %281 = vmatpush2.msra.mxu0 0.0
    %282 = vmatprep.subr.mxu0 0.0
    %283 = vmatpush2.msra.mxu0 0.0
    %284 = vmatprep.subr.mxu0 0.0
    %285 = vmatpush2.msra.mxu0 0.0
    %286 = vmatprep.subr.mxu0 0.0
    %287 = vmatpush2.msra.mxu0 0.0
    %288 = vmatprep.subr.mxu0 0.0
    %289 = vmatpush2.msra.mxu0 0.0
    %290 = vmatprep.subr.mxu0 0.0
    %291 = vmatpush2.msra.mxu0 0.0
    %292 = vmatprep.subr.mxu0 0.0
    %293 = vmatpush2.msra.mxu0 0.0
    %294 = vmatprep.subr.mxu0 0.0
    %295 = vmatpush2.msra.mxu0 0.0
    %296 = vmatprep.subr.mxu0 0.0
    %297 = vmatpush2.msra.mxu0 0.0
    %298 = vmatprep.subr.mxu0 0.0
    %299 = vmatpush2.msra.mxu0 0.0
    %300 = vmatprep.subr.mxu0 0.0
    %301 = vmatpush2.msra.mxu0 0.0
    %302 = vmatprep.subr.mxu0 0.0
    %303 = vmatpush2.msra.mxu0 0.0
    %304 = vmatprep.subr.mxu0 0.0
    %305 = vmatpush2.msra.mxu0 0.0
    %306 = vmatprep.subr.mxu0 0.0
    %307 = vmatpush2.msra.mxu0 0.0
    %308 = vmatprep.subr.mxu0 0.0
    %309 = vmatpush2.msra.mxu0 0.0
    %310 = vmatprep.subr.mxu0 0.0
    %311 = vmatpush2.msra.mxu0 0.0
    %312 = vmatprep.mubr.f32.mxu0 0.0
    %313 = vmatmul.mubr.f32.gmra.mxu0 %v246
    %v314 = vpop.f32.mrf.mxu0
    %v315 = vadd.f32 %v243, %v314
    %v316 = vpop.f32.mrf.mxu0
    %317 = vdwg.mxu0
    %s318 = scalar_lea.vmem [#allocation2], 24
    %v319 = vld [vmem:[%s318] sm:$0xff]
    %s320 = scalar_lea.vmem [#allocation5], 96
    %v321 = vld [vmem:[%s320] sm:$0xff]
    %v322 = vld [vmem:[%s320 + $0x8] sm:$0xff]
    %v323 = vld [vmem:[%s320 + $0x10] sm:$0xff]
    %v324 = vld [vmem:[%s320 + $0x18] sm:$0xff]
    %s325 = scalar_lea.vmem [#allocation7], 3
    %v326 = vld [vmem:[%s325] sm:$0x1]
    %v328 = vlaneseq
    %v329 = vshrl.u32 %v328, 7
    %v330 = vsub.s32 0, %v329
    %v331 = vrot.slane %v326, %v330
    %v334 = vsel %vm68, %v319, 0
    %336 = vmatprep.subr.mxu0 0.0
    %337 = vmatpush1.msra.mxu0 0.0
    %338 = vmatprep.subr.mxu0 0.0
    %339 = vmatpush1.msra.mxu0 0.0
    %340 = vmatprep.subr.mxu0 0.0
    %341 = vmatpush1.msra.mxu0 0.0
    %342 = vmatprep.subr.mxu0 0.0
    %343 = vmatpush1.msra.mxu0 0.0
    %344 = vmatprep.subr.mxu0 0.0
    %345 = vmatpush1.msra.mxu0 0.0
    %346 = vmatprep.subr.mxu0 0.0
    %347 = vmatpush1.msra.mxu0 0.0
    %348 = vmatprep.subr.mxu0 0.0
    %349 = vmatpush1.msra.mxu0 0.0
    %350 = vmatprep.subr.mxu0 0.0
    %351 = vmatpush1.msra.mxu0 0.0
    %352 = vmatprep.subr.mxu0 0.0
    %353 = vmatpush1.msra.mxu0 0.0
    %354 = vmatprep.subr.mxu0 0.0
    %355 = vmatpush1.msra.mxu0 0.0
    %356 = vmatprep.subr.mxu0 0.0
    %357 = vmatpush1.msra.mxu0 0.0
    %358 = vmatprep.subr.mxu0 0.0
    %359 = vmatpush1.msra.mxu0 0.0
    %360 = vmatprep.subr.mxu0 0.0
    %361 = vmatpush1.msra.mxu0 %v324
    %362 = vmatprep.subr.mxu0 0.0
    %363 = vmatpush1.msra.mxu0 %v323
    %364 = vmatprep.subr.mxu0 0.0
    %365 = vmatpush1.msra.mxu0 %v322
    %366 = vmatprep.subr.mxu0 0.0
    %367 = vmatpush1.msra.mxu0 %v321
    %368 = vmatprep.subr.mxu0 0.0
    %369 = vmatpush2.msra.mxu0 0.0
    %370 = vmatprep.subr.mxu0 0.0
    %371 = vmatpush2.msra.mxu0 0.0
    %372 = vmatprep.subr.mxu0 0.0
    %373 = vmatpush2.msra.mxu0 0.0
    %374 = vmatprep.subr.mxu0 0.0
    %375 = vmatpush2.msra.mxu0 0.0
    %376 = vmatprep.subr.mxu0 0.0
    %377 = vmatpush2.msra.mxu0 0.0
    %378 = vmatprep.subr.mxu0 0.0
    %379 = vmatpush2.msra.mxu0 0.0
    %380 = vmatprep.subr.mxu0 0.0
    %381 = vmatpush2.msra.mxu0 0.0
    %382 = vmatprep.subr.mxu0 0.0
    %383 = vmatpush2.msra.mxu0 0.0
    %384 = vmatprep.subr.mxu0 0.0
    %385 = vmatpush2.msra.mxu0 0.0
    %386 = vmatprep.subr.mxu0 0.0
    %387 = vmatpush2.msra.mxu0 0.0
    %388 = vmatprep.subr.mxu0 0.0
    %389 = vmatpush2.msra.mxu0 0.0
    %390 = vmatprep.subr.mxu0 0.0
    %391 = vmatpush2.msra.mxu0 0.0
    %392 = vmatprep.subr.mxu0 0.0
    %393 = vmatpush2.msra.mxu0 0.0
    %394 = vmatprep.subr.mxu0 0.0
    %395 = vmatpush2.msra.mxu0 0.0
    %396 = vmatprep.subr.mxu0 0.0
    %397 = vmatpush2.msra.mxu0 0.0
    %398 = vmatprep.subr.mxu0 0.0
    %399 = vmatpush2.msra.mxu0 0.0
    %400 = vmatprep.mubr.f32.mxu0 0.0
    %401 = vmatmul.mubr.f32.gmra.mxu0 %v334
    %v402 = vpop.f32.mrf.mxu0
    %v403 = vadd.f32 %v331, %v402
    %v404 = vpop.f32.mrf.mxu0
    %405 = vdwg.mxu0
    %407 = vrot.lane.b32.xlu0 %v227, 32
    %v408 = vpop.permute.xlu0 %407
    %411 = vrot.lane.b32.xlu0 %v315, 64
    %v412 = vpop.permute.xlu0 %411
    %415 = vrot.lane.b32.xlu0 %v403, 96
    %v416 = vpop.permute.xlu0 %415
    %v418 = vsel %vm68, %v139, %v408
    %vm419 = vcmask 523264
    %v420 = vsel %vm419, %v418, %v412
    %vm421 = vcmask 785408
    %v422 = vsel %vm421, %v420, %v416
    %423 = vst [vmem:[#allocation8] sm:$0xff] %v422
    // Predicated region
    $region26: #{tpu_custom_call.1} parent=1 // pred_check
      _
    $region27: #{tpu_custom_call.1} parent=1 // pred_check_branch
      %425 = sbr.rel (0) target = $region29
    $region28: #{tpu_custom_call.1} parent=1 // pred_region
      %s427 = ssub.s32 128, 128
      %428 = vsyncadd [#allocation4], %s427
      %s430 = sshll.u32 [#allocation8], 4
      %s431 = int_to_ptr.vmem [resolvable:$true] %s430
      %433 = dma.vmem_to_hbm [thread:$0]  %s431, 128, %s3, [#allocation4]
    $region29: #{tpu_custom_call.1} parent=1 // pred_fallthru
      _
    // Predicated region
    $region30: #{tpu_custom_call.1} parent=1 // pred_check
      _
    $region31: #{tpu_custom_call.1} parent=1 // pred_check_branch
      %435 = sbr.rel (0) target = $region33
    $region32: #{tpu_custom_call.1} parent=1 // pred_region
      %436 = dma.done [#allocation4], 128
    $region33: #{tpu_custom_call.1} parent=1 // pred_fallthru
      _
    %437 = vsyncpa [#allocation3], 1
    %438 = vsyncpa [#allocation6], 1
    %439 = vsyncpa [#allocation4], 1

</llo_original>
